<compile_context>
chip_gen: v7x
topology: tpu7x:2x2x1
jax: 0.10.0
libtpu: 0.0.40
codegen_flags: <defaults>
</compile_context>

<pallas_src>
import math
from functools import partial

import jax
import jax.numpy as jnp
from jax import lax
from jax.experimental import pallas as pl
from jax.experimental.pallas import tpu as pltpu

_LN_EPS = 1e-5                   # torch.nn.LayerNorm default
_VMEM_LIMIT = 48 << 20           # safe on v5e/v6e (128 MiB) and v7x (64 MiB physical)
_MLP_RESIDENT_BUDGET = 36 << 20  # budget for the weight-resident MLP path


# ----------------------------- helpers ------------------------------------- #

def _round_up(x, m):
    return ((x + m - 1) // m) * m


def _row_tile(m, cap):
    """Largest multiple-of-8 divisor of m (m itself a multiple of 8) that is <= cap."""
    cap = max(8, min(cap, m))
    t = cap - (cap % 8)
    while t >= 8:
        if m % t == 0:
            return t
        t -= 8
    return 8


def _lane_tile(full, cap):
    """Largest multiple-of-128 divisor of `full` that is <= cap, else the full dim."""
    if full <= cap or full % 128 != 0:
        return full
    t = (cap // 128) * 128
    while t >= 128:
        if full % t == 0:
            return t
        t -= 128
    return full


def _pad_rows8(x2):
    m = x2.shape[0]
    mp = _round_up(m, 8)
    if mp == m:
        return x2
    return jnp.pad(x2, ((0, mp - m), (0, 0)))


def _gelu_exact(x):
    # PyTorch F.gelu default: 0.5 * x * (1 + erf(x / sqrt(2)))
    return 0.5 * x * (1.0 + lax.erf(x * (1.0 / math.sqrt(2.0))))


def _ln_f32(x, g, b):
    xf = x.astype(jnp.float32)
    mu = jnp.mean(xf, axis=-1, keepdims=True)
    xc = xf - mu
    var = jnp.mean(xc * xc, axis=-1, keepdims=True)
    return xc * lax.rsqrt(var + _LN_EPS) * g.astype(jnp.float32) + b.astype(jnp.float32)


def _patchify(x, p):
    # Conv2d(kernel=stride=P) == per-patch linear on flattened (C, P, P) patches.
    b, c, hh, ww = x.shape
    gh, gw = hh // p, ww // p
    patches = x.reshape(b, c, gh, p, gw, p).transpose(0, 2, 4, 1, 3, 5)
    return patches.reshape(b, gh * gw, c * p * p)


# ------------------- GEMM + bias (+ optional residual) ---------------------- #

def _matmul_bias_kernel(x_ref, w_ref, b_ref, o_ref):
    acc = jnp.dot(x_ref[...], w_ref[...], preferred_element_type=jnp.float32)
    o_ref[...] = (acc + b_ref[...].astype(jnp.float32)).astype(o_ref.dtype)


def _matmul_bias_res_kernel(x_ref, w_ref, b_ref, r_ref, o_ref):
    acc = jnp.dot(x_ref[...], w_ref[...], preferred_element_type=jnp.float32)
    acc = acc + b_ref[...].astype(jnp.float32) + r_ref[...].astype(jnp.float32)
    o_ref[...] = acc.astype(o_ref.dtype)


def matmul_bias_pallas(x2, w, b, residual=None, *, tm=512):
    """(M, K) @ (K, N) + b [+ residual].  W stays VMEM-resident across row tiles."""
    m, k = x2.shape
    n = w.shape[1]
    xp = _pad_rows8(x2)
    mp = xp.shape[0]
    tm = _row_tile(mp, tm)
    b2 = b.reshape(1, n)

    flops = 2 * mp * k * n
    bytes_accessed = (xp.size * xp.dtype.itemsize + w.size * w.dtype.itemsize
                      + n * b.dtype.itemsize + mp * n * xp.dtype.itemsize)

    x_spec = pl.BlockSpec((tm, k), lambda i: (i, 0))
    w_spec = pl.BlockSpec((k, n), lambda i: (0, 0))      # constant index -> resident
    b_spec = pl.BlockSpec((1, n), lambda i: (0, 0))
    o_spec = pl.BlockSpec((tm, n), lambda i: (i, 0))

    if residual is None:
        kernel = _matmul_bias_kernel
        in_specs = [x_spec, w_spec, b_spec]
        operands = (xp, w, b2)
    else:
        rp = _pad_rows8(residual)
        kernel = _matmul_bias_res_kernel
        in_specs = [x_spec, w_spec, b_spec, pl.BlockSpec((tm, n), lambda i: (i, 0))]
        operands = (xp, w, b2, rp)

    out = pl.pallas_call(
        kernel,
        out_shape=jax.ShapeDtypeStruct((mp, n), x2.dtype),
        grid_spec=pltpu.PrefetchScalarGridSpec(
            num_scalar_prefetch=0,
            grid=(mp // tm,),
            in_specs=in_specs,
            out_specs=o_spec),
        compiler_params=pltpu.CompilerParams(
            dimension_semantics=("parallel",),
            vmem_limit_bytes=_VMEM_LIMIT),
        cost_estimate=pl.CostEstimate(flops=flops, transcendentals=0,
                                      bytes_accessed=bytes_accessed),
    )(*operands)
    return out[:m]


# -------------------- fused LayerNorm + GEMM (QKV, no bias) ------------------ #

def _ln_matmul_kernel(x_ref, g_ref, b_ref, w_ref, o_ref):
    y = _ln_f32(x_ref[...], g_ref[...], b_ref[...]).astype(w_ref.dtype)
    o_ref[...] = jnp.dot(y, w_ref[...],
                         preferred_element_type=jnp.float32).astype(o_ref.dtype)


def ln_matmul_pallas(x2, gamma, beta, w, *, tm=512):
    m, d = x2.shape
    n = w.shape[1]
    xp = _pad_rows8(x2)
    mp = xp.shape[0]
    tm = _row_tile(mp, tm)

    out = pl.pallas_call(
        _ln_matmul_kernel,
        out_shape=jax.ShapeDtypeStruct((mp, n), x2.dtype),
        grid_spec=pltpu.PrefetchScalarGridSpec(
            num_scalar_prefetch=0,
            grid=(mp // tm,),
            in_specs=[
                pl.BlockSpec((tm, d), lambda i: (i, 0)),
                pl.BlockSpec((1, d), lambda i: (0, 0)),
                pl.BlockSpec((1, d), lambda i: (0, 0)),
                pl.BlockSpec((d, n), lambda i: (0, 0)),   # resident weight
            ],
            out_specs=pl.BlockSpec((tm, n), lambda i: (i, 0))),
        compiler_params=pltpu.CompilerParams(
            dimension_semantics=("parallel",),
            vmem_limit_bytes=_VMEM_LIMIT),
        cost_estimate=pl.CostEstimate(
            flops=2 * mp * d * n, transcendentals=0,
            bytes_accessed=(xp.size * xp.dtype.itemsize + w.size * w.dtype.itemsize
                            + mp * n * xp.dtype.itemsize)),
    )(xp, gamma.reshape(1, d), beta.reshape(1, d), w)
    return out[:m]


# -------------- fused LayerNorm + MLP (fc1 + GELU + fc2) + residual ---------- #

def _ln_mlp_res_kernel(x_ref, g_ref, b_ref, w1_ref, b1_ref, w2_ref, b2_ref, r_ref, o_ref):
    y = _ln_f32(x_ref[...], g_ref[...], b_ref[...]).astype(w1_ref.dtype)
    h = jnp.dot(y, w1_ref[...], preferred_element_type=jnp.float32)
    h = _gelu_exact(h + b1_ref[...].astype(jnp.float32))
    # TODO(synk): mlp_dropout > 0 not implemented (config default p=0 -> identity).
    out = jnp.dot(h.astype(w2_ref.dtype), w2_ref[...], preferred_element_type=jnp.float32)
    out = out + b2_ref[...].astype(jnp.float32) + r_ref[...].astype(jnp.float32)
    o_ref[...] = out.astype(o_ref.dtype)


def _ln_mlp_res_tiled_kernel(x_ref, g_ref, b_ref, w1_ref, b1_ref, w2_ref, b2_ref,
                             r_ref, o_ref, acc_ref):
    j = pl.program_id(1)

    @pl.when(j == 0)
    def _():
        acc_ref[...] = jnp.zeros_like(acc_ref)

    y = _ln_f32(x_ref[...], g_ref[...], b_ref[...]).astype(w1_ref.dtype)
    h = jnp.dot(y, w1_ref[...], preferred_element_type=jnp.float32)
    h = _gelu_exact(h + b1_ref[...].astype(jnp.float32))
    acc_ref[...] += jnp.dot(h.astype(w2_ref.dtype), w2_ref[...],
                            preferred_element_type=jnp.float32)

    @pl.when(j == pl.num_programs(1) - 1)
    def _():
        out = acc_ref[...] + b2_ref[...].astype(jnp.float32) + r_ref[...].astype(jnp.float32)
        o_ref[...] = out.astype(o_ref.dtype)


def ln_mlp_residual_pallas(x2, gamma, beta, w1, b1, w2, b2, residual, *, tm=512, th=1024):
    m, d = x2.shape
    hdim = w1.shape[1]
    xp = _pad_rows8(x2)
    rp = _pad_rows8(residual)
    mp = xp.shape[0]
    tm = _row_tile(mp, tm)

    g2 = gamma.reshape(1, d)
    be2 = beta.reshape(1, d)
    b1r = b1.reshape(1, hdim)
    b2r = b2.reshape(1, d)

    flops = 4 * mp * d * hdim
    bytes_accessed = (xp.size * xp.dtype.itemsize
                      + (w1.size + w2.size) * w1.dtype.itemsize
                      + 2 * mp * d * xp.dtype.itemsize)
    cost = pl.CostEstimate(flops=flops, transcendentals=mp * hdim,
                           bytes_accessed=bytes_accessed)

    # Weight-resident path when (double-buffered) weights + activation tiles fit VMEM.
    weight_bytes = 2 * (w1.size + w2.size) * w1.dtype.itemsize
    act_bytes = tm * (4 * d * xp.dtype.itemsize + 4 * hdim)
    if weight_bytes + 2 * act_bytes <= _MLP_RESIDENT_BUDGET:
        out = pl.pallas_call(
            _ln_mlp_res_kernel,
            out_shape=jax.ShapeDtypeStruct((mp, d), x2.dtype),
            grid_spec=pltpu.PrefetchScalarGridSpec(
                num_scalar_prefetch=0,
                grid=(mp // tm,),
                in_specs=[
                    pl.BlockSpec((tm, d), lambda i: (i, 0)),
                    pl.BlockSpec((1, d), lambda i: (0, 0)),
                    pl.BlockSpec((1, d), lambda i: (0, 0)),
                    pl.BlockSpec((d, hdim), lambda i: (0, 0)),   # resident
                    pl.BlockSpec((1, hdim), lambda i: (0, 0)),
                    pl.BlockSpec((hdim, d), lambda i: (0, 0)),   # resident
                    pl.BlockSpec((1, d), lambda i: (0, 0)),
                    pl.BlockSpec((tm, d), lambda i: (i, 0)),
                ],
                out_specs=pl.BlockSpec((tm, d), lambda i: (i, 0))),
            compiler_params=pltpu.CompilerParams(
                dimension_semantics=("parallel",),
                vmem_limit_bytes=_VMEM_LIMIT),
            cost_estimate=cost,
        )(xp, g2, be2, w1, b1r, w2, b2r, rp)
        return out[:m]

    # Fallback: stream hidden-dim tiles of w1/w2 (large configs, e.g. v7x 64 MiB VMEM).
    th = _lane_tile(hdim, th)
    out = pl.pallas_call(
        _ln_mlp_res_tiled_kernel,
        out_shape=jax.ShapeDtypeStruct((mp, d), x2.dtype),
        grid_spec=pltpu.PrefetchScalarGridSpec(
            num_scalar_prefetch=0,
            grid=(mp // tm, hdim // th),
            in_specs=[
                pl.BlockSpec((tm, d), lambda i, j: (i, 0)),
                pl.BlockSpec((1, d), lambda i, j: (0, 0)),
                pl.BlockSpec((1, d), lambda i, j: (0, 0)),
                pl.BlockSpec((d, th), lambda i, j: (0, j)),
                pl.BlockSpec((1, th), lambda i, j: (0, j)),
                pl.BlockSpec((th, d), lambda i, j: (j, 0)),
                pl.BlockSpec((1, d), lambda i, j: (0, 0)),
                pl.BlockSpec((tm, d), lambda i, j: (i, 0)),
            ],
            out_specs=pl.BlockSpec((tm, d), lambda i, j: (i, 0)),
            scratch_shapes=[pltpu.VMEM((tm, d), jnp.float32)]),
        compiler_params=pltpu.CompilerParams(
            dimension_semantics=("parallel", "arbitrary"),
            vmem_limit_bytes=_VMEM_LIMIT),
        cost_estimate=cost,
    )(xp, g2, be2, w1, b1r, w2, b2r, rp)
    return out[:m]


# --------------------------- multi-head attention ---------------------------- #

def _attention_kernel(qkv_ref, o_ref, *, nh, hd, scale, true_s):
    """qkv_ref: (S_pad, 3*D), column order [Q heads | K heads | V heads]; o_ref: (S_pad, D)."""
    s_pad = qkv_ref.shape[0]
    d = nh * hd
    qkv = qkv_ref[...]
    need_mask = true_s < s_pad
    if need_mask:
        kmask = lax.broadcasted_iota(jnp.int32, (s_pad, s_pad), 1) < true_s

    outs = []
    for h in range(nh):                                   # static unroll over heads
        q = qkv[:, h * hd:(h + 1) * hd]
        k = qkv[:, d + h * hd: d + (h + 1) * hd]
        v = qkv[:, 2 * d + h * hd: 2 * d + (h + 1) * hd]
        s = jnp.einsum('qd,kd->qk', q, k, preferred_element_type=jnp.float32) * scale
        if need_mask:
            s = jnp.where(kmask, s, -jnp.inf)              # mask padded keys
        mx = jnp.max(s, axis=-1, keepdims=True)
        p = jnp.exp(s - mx)
        inv = pl.reciprocal(jnp.sum(p, axis=-1, keepdims=True), approx=True)
        p = p * inv
        # TODO(synk): attention_dropout > 0 not implemented (config default p=0 -> identity).
        outs.append(jnp.dot(p.astype(v.dtype), v, preferred_element_type=jnp.float32))
    o_ref[...] = jnp.concatenate(outs, axis=-1).astype(o_ref.dtype)   # lane-dense (S, D) store


def attention_pallas(qkv, *, nh, hd, scale, true_s):
    """qkv: (B, S_pad, 3*D) -> (B, S_pad, D); one batch element (all heads) per grid step."""
    b, s_pad, _ = qkv.shape
    d = nh * hd
    kern = partial(_attention_kernel, nh=nh, hd=hd, scale=scale, true_s=true_s)
    return pl.pallas_call(
        kern,
        out_shape=jax.ShapeDtypeStruct((b, s_pad, d), qkv.dtype),
        grid_spec=pltpu.PrefetchScalarGridSpec(
            num_scalar_prefetch=0,
            grid=(b,),
            in_specs=[pl.BlockSpec((None, s_pad, 3 * d), lambda i: (i, 0, 0))],
            out_specs=pl.BlockSpec((None, s_pad, d), lambda i: (i, 0, 0))),
        compiler_params=pltpu.CompilerParams(
            dimension_semantics=("parallel",),
            vmem_limit_bytes=_VMEM_LIMIT),
        cost_estimate=pl.CostEstimate(
            flops=4 * b * s_pad * s_pad * d,
            transcendentals=b * nh * s_pad * s_pad,
            bytes_accessed=(qkv.size + b * s_pad * d) * qkv.dtype.itemsize),
    )(qkv)


# ------------------------------- full model ---------------------------------- #

def init_vit_params(key, cfg, dtype=jnp.bfloat16):
    d = cfg['dim']
    hdim = cfg['hidden_dim'] or 4 * d
    p = cfg['patch_size']
    c = cfg['in_channels']
    nseq = (cfg['image_size'] // p) ** 2 + 1
    std = 0.02

    keys = jax.random.split(key, 8 + 8 * cfg['num_blocks'])
    ki = iter(keys)

    def nrm(shape):
        return std * jax.random.normal(next(ki), shape, dtype)

    params = {
        'patch_w': nrm((c * p * p, d)),          # Conv2d(kernel=stride=P) as a matmul
        'patch_b': jnp.zeros((d,), dtype),
        'cls': nrm((1, 1, d)),
        'pos': nrm((1, nseq, d)),
        'blocks': [],
    }
    for _ in range(cfg['num_blocks']):
        params['blocks'].append({
            'ln1_g': jnp.ones((d,), dtype), 'ln1_b': jnp.zeros((d,), dtype),
            'qkv_w': nrm((d, 3 * d)),             # attention_bias=False -> no bias
            'out_w': nrm((d, d)), 'out_b': jnp.zeros((d,), dtype),
            'ln2_g': jnp.ones((d,), dtype), 'ln2_b': jnp.zeros((d,), dtype),
            'w1': nrm((d, hdim)), 'b1': jnp.zeros((hdim,), dtype),
            'w2': nrm((hdim, d)), 'b2': jnp.zeros((d,), dtype),
        })
    if cfg['num_classes'] is not None:
        params['head_w'] = nrm((d, cfg['num_classes']))
        params['head_b'] = jnp.zeros((cfg['num_classes'],), dtype)
    return params


def vit_forward_pallas(x, params, cfg):
    d = cfg['dim']
    nh = cfg['num_heads']
    hd = d // nh
    scale = cfg['attention_scale'] if cfg['attention_scale'] is not None else hd ** -0.5
    dtype = params['patch_w'].dtype

    b = x.shape[0]
    patches = _patchify(x.astype(dtype), cfg['patch_size'])        # (B, nP, C*P*P)
    npatch = patches.shape[1]

    tok = matmul_bias_pallas(patches.reshape(b * npatch, -1),
                             params['patch_w'], params['patch_b'])
    tok = tok.reshape(b, npatch, d)

    # CLS token + positional embeddings (layout glue in JAX).
    cls = jnp.broadcast_to(params['cls'].astype(dtype), (b, 1, d))
    out = jnp.concatenate([cls, tok], axis=1) + params['pos'].astype(dtype)
    s = out.shape[1]

    # Pad the token dim ONCE to a multiple of 8; attention masks the padded keys.
    s_pad = _round_up(s, 8)
    if s_pad != s:
        out = jnp.pad(out, ((0, 0), (0, s_pad - s), (0, 0)))

    for blk in params['blocks']:
        x2 = out.reshape(b * s_pad, d)
        # LN1 fused into QKV projection (attention_bias=False -> no bias).
        qkv = ln_matmul_pallas(x2, blk['ln1_g'], blk['ln1_b'], blk['qkv_w'])
        # All heads per batch element; lane-dense (S, D) output -> no XLA transposes.
        attn = attention_pallas(qkv.reshape(b, s_pad, 3 * d),
                                nh=nh, hd=hd, scale=scale, true_s=s)
        # Output projection with fused residual add (DropPath p=0 -> identity).
        x2 = matmul_bias_pallas(attn.reshape(b * s_pad, d),
                                blk['out_w'], blk['out_b'], residual=x2)
        # LN2 + MLP + residual fused (DropPath p=0 -> identity).
        x2 = ln_mlp_residual_pallas(x2, blk['ln2_g'], blk['ln2_b'],
                                    blk['w1'], blk['b1'], blk['w2'], blk['b2'],
                                    residual=x2)
        out = x2.reshape(b, s_pad, d)

    cls_out = out[:, 0]
    if 'head_w' in params:
        return matmul_bias_pallas(cls_out, params['head_w'], params['head_b'])
    return cls_out


def vit_forward_reference(x, params, cfg):
    """Pure-JAX f32 reference with identical math (for correctness check)."""
    d = cfg['dim']
    nh = cfg['num_heads']
    hd = d // nh
    scale = cfg['attention_scale'] if cfg['attention_scale'] is not None else hd ** -0.5

    def ln(z, g, bb):
        mu = jnp.mean(z, axis=-1, keepdims=True)
        var = jnp.mean((z - mu) ** 2, axis=-1, keepdims=True)
        return (z - mu) * lax.rsqrt(var + _LN_EPS) * g + bb

    b = x.shape[0]
    patches = _patchify(x, cfg['patch_size'])
    tok = patches @ params['patch_w'] + params['patch_b']
    cls = jnp.broadcast_to(params['cls'], (b, 1, d))
    out = jnp.concatenate([cls, tok], axis=1) + params['pos']
    s = out.shape[1]
    for blk in params['blocks']:
        y = ln(out, blk['ln1_g'], blk['ln1_b'])
        qkv = (y @ blk['qkv_w']).reshape(b, s, 3, nh, hd).transpose(2, 0, 3, 1, 4)
        q, k, v = qkv[0], qkv[1], qkv[2]
        att = jax.nn.softmax(jnp.einsum('bhqd,bhkd->bhqk', q, k) * scale, axis=-1)
        o = jnp.einsum('bhqk,bhkd->bhqd', att, v)
        o = o.transpose(0, 2, 1, 3).reshape(b, s, d)
        out = out + (o @ blk['out_w'] + blk['out_b'])
        y = ln(out, blk['ln2_g'], blk['ln2_b'])
        h = _gelu_exact(y @ blk['w1'] + blk['b1'])
        out = out + (h @ blk['w2'] + blk['b2'])
    cls_out = out[:, 0]
    if 'head_w' in params:
        return cls_out @ params['head_w'] + params['head_b']
    return cls_out


if __name__ == "__main__":
    # Small ViT config: 16x16 image, 4x4 patches -> 16 patches + CLS = 17 tokens (padded to 24).
    cfg = dict(image_size=16, patch_size=4, in_channels=3, dim=64, hidden_dim=None,
               num_blocks=2, num_heads=4, attention_scale=None, num_classes=10)

    key = jax.random.PRNGKey(0)
    kx, kp = jax.random.split(key)
    x = jax.random.normal(
        kx, (2, cfg['in_channels'], cfg['image_size'], cfg['image_size']), jnp.float32)

    # 1) f32 run: tight correctness check of the kernels against the pure-JAX reference.
    params_f32 = init_vit_params(kp, cfg, dtype=jnp.float32)
    out_f32 = jax.block_until_ready(vit_forward_pallas(x, params_f32, cfg))
    ref_f32 = vit_forward_reference(x, params_f32, cfg)
    assert out_f32.shape == (2, cfg['num_classes'])
    assert jnp.allclose(out_f32, ref_f32, atol=2e-3, rtol=2e-3), (
        float(jnp.max(jnp.abs(out_f32 - ref_f32))))

    # 2) bf16 run: the performance configuration (bf16 operands, f32 accumulation).
    params_bf16 = jax.tree_util.tree_map(lambda a: a.astype(jnp.bfloat16), params_f32)
    out_bf16 = jax.block_until_ready(vit_forward_pallas(x, params_bf16, cfg))
    ref_bf16p = vit_forward_reference(
        x, jax.tree_util.tree_map(lambda a: a.astype(jnp.float32), params_bf16), cfg)
    o32 = out_bf16.astype(jnp.float32)
    assert jnp.all(jnp.isfinite(o32))
    rel = jnp.linalg.norm(o32 - ref_bf16p) / (jnp.linalg.norm(ref_bf16p) + 1e-8)
    assert float(rel) < 0.1, float(rel)   # looser tolerance: expected bf16 rounding, not a bug

    print("KERNEL_OK")
</pallas_src>

<mosaic_0001>
module attributes {stable_mosaic.version = 11 : i64} {
  func.func @_matmul_bias_kernel(%arg0: i32, %arg1: memref<32x48xf32, #tpu.memory_space<vmem>>, %arg2: memref<48x64xf32, #tpu.memory_space<vmem>>, %arg3: memref<1x64xf32, #tpu.memory_space<vmem>>, %arg4: memref<32x64xf32, #tpu.memory_space<vmem>>) attributes {dimension_semantics = [#tpu.dimension_semantics<parallel>], iteration_bounds = array<i64: 1>, scalar_prefetch = 0 : i64, scratch_operands = 0 : i64, tpu.core_type = #tpu.core_type<tc>, window_params = [{transform_indices = @transform_0, window_bounds = array<i64: 32, 48>}, {pipeline_mode = #tpu.pipeline_mode<synchronous>, transform_indices = @transform_1, window_bounds = array<i64: 48, 64>}, {pipeline_mode = #tpu.pipeline_mode<synchronous>, transform_indices = @transform_2, window_bounds = array<i64: 1, 64>}, {transform_indices = @transform_3, window_bounds = array<i64: 32, 64>}]} {
    %c0 = arith.constant 0 : index
    %c0_0 = arith.constant 0 : index
    %0 = vector.load %arg1[%c0, %c0_0] : memref<32x48xf32, #tpu.memory_space<vmem>>, vector<32x48xf32>
    %c0_1 = arith.constant 0 : index
    %c0_2 = arith.constant 0 : index
    %1 = vector.load %arg2[%c0_1, %c0_2] : memref<48x64xf32, #tpu.memory_space<vmem>>, vector<48x64xf32>
    %cst = arith.constant dense<0.000000e+00> : vector<32x64xf32>
    %2 = tpu.matmul %0, %1, %cst {dimension_numbers = #tpu.dot_dimension_numbers<[1], [0], [0], [1], [0, 0, 1, 1], [], []>} : vector<32x48xf32>, vector<48x64xf32>, vector<32x64xf32> -> vector<32x64xf32>
    %c0_3 = arith.constant 0 : index
    %c0_4 = arith.constant 0 : index
    %3 = vector.load %arg3[%c0_3, %c0_4] : memref<1x64xf32, #tpu.memory_space<vmem>>, vector<1x64xf32>
    %4 = vector.broadcast %3 : vector<1x64xf32> to vector<32x64xf32>
    %5 = arith.addf %2, %4 : vector<32x64xf32>
    %c0_5 = arith.constant 0 : index
    %c0_6 = arith.constant 0 : index
    %6 = vector.load %arg4[%c0_5, %c0_6] : memref<32x64xf32, #tpu.memory_space<vmem>>, vector<32x64xf32>
    tpu.vector_store %arg4[%c0_5, %c0_6], %5 {strides = array<i32>} : memref<32x64xf32, #tpu.memory_space<vmem>>, vector<32x64xf32>,
    return
  }
  func.func @transform_0(%arg0: i32) -> (i32, i32) {
    %c0_i32 = arith.constant 0 : i32
    %c0_i32_0 = arith.constant 0 : i32
    return %arg0, %c0_i32 : i32, i32
  }
  func.func @transform_1(%arg0: i32) -> (i32, i32) {
    %c0_i32 = arith.constant 0 : i32
    %c0_i32_0 = arith.constant 0 : i32
    %c0_i32_1 = arith.constant 0 : i32
    return %c0_i32, %c0_i32_0 : i32, i32
  }
  func.func @transform_2(%arg0: i32) -> (i32, i32) {
    %c0_i32 = arith.constant 0 : i32
    %c0_i32_0 = arith.constant 0 : i32
    %c0_i32_1 = arith.constant 0 : i32
    return %c0_i32, %c0_i32_0 : i32, i32
  }
  func.func @transform_3(%arg0: i32) -> (i32, i32) {
    %c0_i32 = arith.constant 0 : i32
    %c0_i32_0 = arith.constant 0 : i32
    return %arg0, %c0_i32 : i32, i32
  }
}

</mosaic_0001>

<llo_original>
// kernel: tpu_custom_call.1
$region0: #{tpu_custom_call.1}
  #allocation0 [shape = 'u32[]', space=smem, size = 0x4, offset = 0x4, fixed_abs, tag = 'smem constant byte address 0x4 - core index']
  #allocation1 [shape = 'u32[144,128]{1,0:T(1,128)}', space=vmem, size = 0x12000, scoped, tag = 'internal scratch']
  %s0 = inlined_call_operand.hbm [shape: f32[32,48], index: 0, kind: input, shape index: {}]
  %s1 = inlined_call_operand.hbm [shape: f32[48,64], index: 1, kind: input, shape index: {}]
  %s2 = inlined_call_operand.vmem [shape: f32[1,64], index: 2, kind: input, shape index: {}]
  %s3 = inlined_call_operand.hbm [shape: f32[32,64], index: 3, kind: output, shape index: {}]
  %s4 = sld [smem:[#allocation0]]
  $region30: #{tpu_custom_call.1} parent=0
    _
  %s6 = ssub.s32 1, %s4
  %s7 = scalar_select 0, %s6, %s4
  $region1: #{tpu_custom_call.1} parent=0
    #allocation2 [shape = 'u8[16384]{0}', space=vmem, size = 0x4000, scoped, tag = 'input window, operand 0, single buffered']
    #allocation3 [shape = 's32[1]{0}', space=sflag, size = 0x4, scoped, tag = 'scoped memory for tpu_custom_call.1']
    #allocation4 [shape = 's32[1]{0}', space=sflag, size = 0x4, scoped, tag = 'scoped memory for tpu_custom_call.1']
    #allocation5 [shape = 'u8[24576]{0}', space=vmem, size = 0x6000, scoped, tag = 'input window, operand 1, single buffered']
    #allocation6 [shape = 's32[1]{0}', space=sflag, size = 0x4, scoped, tag = 'scoped memory for tpu_custom_call.1']
    #allocation7 [shape = 'u8[16384]{0}', space=vmem, size = 0x4000, scoped, tag = 'output window, operand 0, single buffered']
    %8 = vsyncpa [#allocation3], 0
    %9 = vsyncpa [#allocation6], 0
    %10 = vsyncpa [#allocation4], 0
    // Predicated region
    $region2: #{tpu_custom_call.1} parent=1 // pred_check
      _
    $region3: #{tpu_custom_call.1} parent=1 // pred_check_branch
      %12 = sbr.rel (0) target = $region5
    $region4: #{tpu_custom_call.1} parent=1 // pred_region
      %s14 = ssub.s32 512, 512
      %15 = vsyncadd [#allocation3], %s14
      %s16 = sshll.u32 [#allocation2], 4
      %s17 = int_to_ptr.vmem [resolvable:$true] %s16
      %22 = dma.hbm_to_vmem [thread:$0]  %s0, 512, %s17, [#allocation3], 128, 128, 8
    $region5: #{tpu_custom_call.1} parent=1 // pred_fallthru
      _
    // Predicated region
    $region6: #{tpu_custom_call.1} parent=1 // pred_check
      _
    $region7: #{tpu_custom_call.1} parent=1 // pred_check_branch
      %24 = sbr.rel (0) target = $region9
    $region8: #{tpu_custom_call.1} parent=1 // pred_region
      %s26 = ssub.s32 768, 768
      %27 = vsyncadd [#allocation6], %s26
      %s28 = sshll.u32 [#allocation5], 4
      %s29 = int_to_ptr.vmem [resolvable:$true] %s28
      %34 = dma.hbm_to_vmem [thread:$0]  %s1, 768, %s29, [#allocation6], 128, 128, 8
    $region9: #{tpu_custom_call.1} parent=1 // pred_fallthru
      _
    // Predicated region
    $region10: #{tpu_custom_call.1} parent=1 // pred_check
      _
    $region11: #{tpu_custom_call.1} parent=1 // pred_check_branch
      %36 = sbr.rel (0) target = $region13
    $region12: #{tpu_custom_call.1} parent=1 // pred_region
      _
    $region13: #{tpu_custom_call.1} parent=1 // pred_fallthru
      _
    // Predicated region
    $region14: #{tpu_custom_call.1} parent=1 // pred_check
      _
    $region15: #{tpu_custom_call.1} parent=1 // pred_check_branch
      %38 = sbr.rel (0) target = $region17
    $region16: #{tpu_custom_call.1} parent=1 // pred_region
      %39 = dma.done [#allocation3], 512
    $region17: #{tpu_custom_call.1} parent=1 // pred_fallthru
      _
    // Predicated region
    $region18: #{tpu_custom_call.1} parent=1 // pred_check
      _
    $region19: #{tpu_custom_call.1} parent=1 // pred_check_branch
      %41 = sbr.rel (0) target = $region21
    $region20: #{tpu_custom_call.1} parent=1 // pred_region
      %42 = dma.done [#allocation6], 768
    $region21: #{tpu_custom_call.1} parent=1 // pred_fallthru
      _
    %v43 = vld [vmem:[#allocation2] sm:$0xff]
    %v44 = vld [vmem:[#allocation2 + $0x8] sm:$0xff]
    %v45 = vld [vmem:[#allocation2 + $0x10] sm:$0xff]
    %v46 = vld [vmem:[#allocation2 + $0x18] sm:$0xff]
    %v47 = vld [vmem:[#allocation5] sm:$0xff]
    %v48 = vld [vmem:[#allocation5 + $0x8] sm:$0xff]
    %v49 = vld [vmem:[#allocation5 + $0x10] sm:$0xff]
    %v50 = vld [vmem:[#allocation5 + $0x18] sm:$0xff]
    %v51 = vld [vmem:[#allocation5 + $0x20] sm:$0xff]
    %v52 = vld [vmem:[#allocation5 + $0x28] sm:$0xff]
    %v53 = vld [vmem:[%s2] sm:$0x1]
    %v55 = vlaneseq
    %v56 = vshrl.u32 %v55, 7
    %v57 = vsub.s32 0, %v56
    %v58 = vrot.slane %v53, %v57
    %vm60 = vcmask 392192
    %v62 = vsel %vm60, %v43, 0
    %v65 = vsel %vm60, %v44, 0
    %v68 = vsel %vm60, %v45, 0
    %v71 = vsel %vm60, %v46, 0
    %73 = vmatprep.subr.mxu0 0.0
    %74 = vmatpush1.msra.mxu0 %v47
    %75 = vmatprep.subr.mxu0 0.0
    %76 = vmatpush1.msra.mxu0 %v48
    %77 = vmatprep.subr.mxu0 0.0
    %78 = vmatpush1.msra.mxu0 %v49
    %79 = vmatprep.subr.mxu0 0.0
    %80 = vmatpush1.msra.mxu0 %v50
    %81 = vmatprep.subr.mxu0 0.0
    %82 = vmatpush1.msra.mxu0 %v51
    %83 = vmatprep.subr.mxu0 0.0
    %84 = vmatpush1.msra.mxu0 %v52
    %85 = vmatprep.subr.mxu0 0.0
    %86 = vmatpush1.msra.mxu0 0.0
    %87 = vmatprep.subr.mxu0 0.0
    %88 = vmatpush1.msra.mxu0 0.0
    %89 = vmatprep.subr.mxu0 0.0
    %90 = vmatpush1.msra.mxu0 0.0
    %91 = vmatprep.subr.mxu0 0.0
    %92 = vmatpush1.msra.mxu0 0.0
    %93 = vmatprep.subr.mxu0 0.0
    %94 = vmatpush1.msra.mxu0 0.0
    %95 = vmatprep.subr.mxu0 0.0
    %96 = vmatpush1.msra.mxu0 0.0
    %97 = vmatprep.subr.mxu0 0.0
    %98 = vmatpush1.msra.mxu0 0.0
    %99 = vmatprep.subr.mxu0 0.0
    %100 = vmatpush1.msra.mxu0 0.0
    %101 = vmatprep.subr.mxu0 0.0
    %102 = vmatpush1.msra.mxu0 0.0
    %103 = vmatprep.subr.mxu0 0.0
    %104 = vmatpush1.msra.mxu0 0.0
    %105 = vmatprep.subr.mxu0 0.0
    %106 = vmatpush1.msra.mxu0 0.0
    %107 = vmatprep.subr.mxu0 0.0
    %108 = vmatpush1.msra.mxu0 0.0
    %109 = vmatprep.subr.mxu0 0.0
    %110 = vmatpush1.msra.mxu0 0.0
    %111 = vmatprep.subr.mxu0 0.0
    %112 = vmatpush1.msra.mxu0 0.0
    %113 = vmatprep.subr.mxu0 0.0
    %114 = vmatpush1.msra.mxu0 0.0
    %115 = vmatprep.subr.mxu0 0.0
    %116 = vmatpush1.msra.mxu0 0.0
    %117 = vmatprep.subr.mxu0 0.0
    %118 = vmatpush1.msra.mxu0 0.0
    %119 = vmatprep.subr.mxu0 0.0
    %120 = vmatpush1.msra.mxu0 0.0
    %121 = vmatprep.subr.mxu0 0.0
    %122 = vmatpush1.msra.mxu0 0.0
    %123 = vmatprep.subr.mxu0 0.0
    %124 = vmatpush1.msra.mxu0 0.0
    %125 = vmatprep.subr.mxu0 0.0
    %126 = vmatpush1.msra.mxu0 0.0
    %127 = vmatprep.subr.mxu0 0.0
    %128 = vmatpush1.msra.mxu0 0.0
    %129 = vmatprep.subr.mxu0 0.0
    %130 = vmatpush1.msra.mxu0 0.0
    %131 = vmatprep.subr.mxu0 0.0
    %132 = vmatpush1.msra.mxu0 0.0
    %133 = vmatprep.subr.mxu0 0.0
    %134 = vmatpush1.msra.mxu0 0.0
    %135 = vmatprep.subr.mxu0 0.0
    %136 = vmatpush1.msra.mxu0 0.0
    %137 = vmatprep.mubr.f32.mxu0 0.0
    %138 = vmatmul.mubr.f32.gmra.mrb[0].mxu0 %v62
    %v139 = vpop.f32.mrb[0].mxu0
    %v140 = vadd.f32 %v58, %v139
    %v141 = vpop.f32.mrb[0].mxu0
    %142 = vmatprep.mubr.f32.mxu0 0.0
    %143 = vmatmul.mubr.f32.gmra.mrb[0].mxu0 %v65
    %v144 = vpop.f32.mrb[0].mxu0
    %v145 = vadd.f32 %v58, %v144
    %v146 = vpop.f32.mrb[0].mxu0
    %147 = vmatprep.mubr.f32.mxu0 0.0
    %148 = vmatmul.mubr.f32.gmra.mrb[0].mxu0 %v68
    %v149 = vpop.f32.mrb[0].mxu0
    %v150 = vadd.f32 %v58, %v149
    %v151 = vpop.f32.mrb[0].mxu0
    %152 = vmatprep.mubr.f32.mxu0 0.0
    %153 = vmatmul.mubr.f32.gmra.mrb[0].mxu0 %v71
    %v154 = vpop.f32.mrb[0].mxu0
    %v155 = vadd.f32 %v58, %v154
    %v156 = vpop.f32.mrb[0].mxu0
    %157 = vdwg.mxu0
    %vm158 = vcmask 523264
    %159 = vst.msk [vmem:[#allocation7] sm:$0xff] %vm158, %v140
    %160 = vst.msk [vmem:[#allocation7 + $0x8] sm:$0xff] %vm158, %v145
    %161 = vst.msk [vmem:[#allocation7 + $0x10] sm:$0xff] %vm158, %v150
    %162 = vst.msk [vmem:[#allocation7 + $0x18] sm:$0xff] %vm158, %v155
    // Predicated region
    $region22: #{tpu_custom_call.1} parent=1 // pred_check
      _
    $region23: #{tpu_custom_call.1} parent=1 // pred_check_branch
      %164 = sbr.rel (0) target = $region25
    $region24: #{tpu_custom_call.1} parent=1 // pred_region
      %s166 = ssub.s32 512, 512
      %167 = vsyncadd [#allocation4], %s166
      %s168 = sshll.u32 [#allocation7], 4
      %s169 = int_to_ptr.vmem [resolvable:$true] %s168
      %174 = dma.vmem_to_hbm [thread:$0]  %s169, 512, %s3, [#allocation4], 128, 128, 8
    $region25: #{tpu_custom_call.1} parent=1 // pred_fallthru
      _
    // Predicated region
    $region26: #{tpu_custom_call.1} parent=1 // pred_check
      _
    $region27: #{tpu_custom_call.1} parent=1 // pred_check_branch
      %176 = sbr.rel (0) target = $region29
    $region28: #{tpu_custom_call.1} parent=1 // pred_region
      %177 = dma.done [#allocation4], 512
    $region29: #{tpu_custom_call.1} parent=1 // pred_fallthru
      _
    %178 = vsyncpa [#allocation3], 1
    %179 = vsyncpa [#allocation6], 1
    %180 = vsyncpa [#allocation4], 1

</llo_original>
